<compile_context>
chip_gen: v7x
topology: tpu7x:2x2x1
jax: 0.10.0
libtpu: 0.0.40
codegen_flags: <defaults>
</compile_context>

<pallas_src>
import jax
import jax.numpy as jnp
from jax.experimental import pallas as pl
from jax.experimental.pallas import tpu as pltpu


# ---------------------------------------------------------------------------
# Fused kernel (per edge tile, everything lane-dense with edges on lanes):
#   onehot_m/d = (iota_N == idx_row)                       # (N, TE)  gather matrices
#   xmT = simT @ onehot_m ; xdT = simT @ onehot_d          # (F, TE)  gathered sim rows
#   hT  = relu(Wm'^T @ xmT + Wd'^T @ xdT + b'^T)           # (HM, TE) folded encoder+MLP
#   s   = sigmoid(w2^T @ hT + b2)                          # (1, TE)  lane-dense scores
# ---------------------------------------------------------------------------
def fused_score_kernel(mi_ref, di_ref, simT_ref, wmT_ref, wdT_ref,
                       bT_ref, w2t_ref, b2_ref, out_ref):
    n = simT_ref.shape[1]
    te = mi_ref.shape[1]

    # One-hot gather matrices built from the lane-dense index rows.
    node_iota = jax.lax.broadcasted_iota(jnp.int32, (n, te), 0)
    onehot_m = (node_iota == mi_ref[...]).astype(jnp.float32)      # (N, TE)
    onehot_d = (node_iota == di_ref[...]).astype(jnp.float32)      # (N, TE)

    # Row gather as an MXU matmul against the VMEM-resident similarity matrix.
    xmT = jnp.dot(simT_ref[...], onehot_m,
                  preferred_element_type=jnp.float32)              # (F, TE)
    xdT = jnp.dot(simT_ref[...], onehot_d,
                  preferred_element_type=jnp.float32)              # (F, TE)

    # Folded encoder + hidden layer:  relu(xm @ Wm' + xd @ Wd' + b')  (transposed).
    hT = (jnp.dot(wmT_ref[...], xmT, preferred_element_type=jnp.float32)
          + jnp.dot(wdT_ref[...], xdT, preferred_element_type=jnp.float32)
          + bT_ref[...])
    hT = jnp.maximum(hT, 0.0)                                      # (HM, TE)

    logits = (jnp.dot(w2t_ref[...], hT, preferred_element_type=jnp.float32)
              + b2_ref[0, 0])                                      # (1, TE)
    out_ref[...] = jax.nn.sigmoid(logits)


# ---------------------------------------------------------------------------
# Helpers: tile choice + VMEM budgeting
# ---------------------------------------------------------------------------
def choose_tile_e(n_edges, max_tile_e=1024, min_steps=4):
    """Largest 128-multiple tile (<= max_tile_e) keeping >= min_steps grid steps,
    so the parallel edge axis still pipelines and shards across v7x's 2 TCs."""
    t = max_tile_e
    while t > 128 and pl.cdiv(n_edges, t) < min_steps:
        t -= 128
    return int(t)


def _padded_vmem_bytes(shape, dtype):
    """Bytes of a VMEM-resident array after (8, 128) tiling of the minor dims."""
    s = list(shape)
    if len(s) == 1:
        s = [1] + s
    s[-1] = pl.cdiv(s[-1], 128) * 128
    s[-2] = pl.cdiv(s[-2], 8) * 8
    n = 1
    for d in s:
        n *= int(d)
    return n * jnp.dtype(dtype).itemsize


# ---------------------------------------------------------------------------
# pallas_call wrapper
# ---------------------------------------------------------------------------
def run_fused_score(m_row, d_row, simT, wmT, wdT, bT, w2t, b2, *, tile_e):
    """m_row/d_row: (1, E_pad) int32 edge indices.  Returns (1, E_pad) scores."""
    assert tile_e % 128 == 0, "edge tile must be lane-dense (multiple of 128)"
    _, e_pad = m_row.shape
    assert e_pad % tile_e == 0
    grid = (e_pad // tile_e,)

    f, n = simT.shape
    hm = wmT.shape[0]

    idx_spec = pl.BlockSpec((1, tile_e), lambda i: (0, i))
    # Constant block index -> fetched once and kept resident in VMEM.
    const = lambda a: pl.BlockSpec(a.shape, lambda i: (0, 0))

    # Right-size the VMEM request: double-buffered edge tiles + resident
    # constants (counted x2 in case the pipeline double-buffers them too)
    # + in-kernel temporaries, with 2x headroom, capped below v7x's 64 MiB.
    tiles = 2 * (2 * _padded_vmem_bytes((1, tile_e), jnp.int32)
                 + _padded_vmem_bytes((1, tile_e), jnp.float32))
    resident = 2 * sum(_padded_vmem_bytes(a.shape, a.dtype)
                       for a in (simT, wmT, wdT, bT, w2t))
    temps = (2 * _padded_vmem_bytes((n, tile_e), jnp.float32)      # one-hots
             + 2 * _padded_vmem_bytes((f, tile_e), jnp.float32)    # xmT / xdT
             + _padded_vmem_bytes((hm, tile_e), jnp.float32))      # hT
    vmem_limit = int(min(max(2 * (tiles + resident + temps), 4 << 20), 48 << 20))

    return pl.pallas_call(
        fused_score_kernel,
        out_shape=jax.ShapeDtypeStruct((1, e_pad), jnp.float32),
        grid=grid,
        in_specs=[idx_spec, idx_spec,
                  const(simT), const(wmT), const(wdT), const(bT), const(w2t),
                  pl.BlockSpec(memory_space=pltpu.MemorySpace.SMEM)],
        out_specs=pl.BlockSpec((1, tile_e), lambda i: (0, i)),
        compiler_params=pltpu.CompilerParams(
            dimension_semantics=("parallel",),
            vmem_limit_bytes=vmem_limit),
    )(m_row, d_row, simT, wmT, wdT, bT, w2t, b2)


# ---------------------------------------------------------------------------
# Full AMHMDA forward
# ---------------------------------------------------------------------------
def amhmda_forward(sim_data, train_data, params, *, max_tile_e=1024):
    # pro_data-style edge index extraction (data.t()).
    edge = train_data.T
    m_idx = edge[0].astype(jnp.int32)
    d_idx = edge[1].astype(jnp.int32)
    e = int(m_idx.shape[0])

    tile_e = choose_tile_e(e, max_tile_e=max_tile_e)
    e_pad = pl.cdiv(e, tile_e) * tile_e
    pad = e_pad - e
    if pad:
        m_idx = jnp.pad(m_idx, (0, pad))   # pads with node 0; sliced off below
        d_idx = jnp.pad(d_idx, (0, pad))
    m_row = m_idx.reshape(1, e_pad)
    d_row = d_idx.reshape(1, e_pad)

    # Exact algebraic fold of the linear encoders into the first MLP layer
    # (valid because Xm/Xd are pure Linear layers in the reference module).
    h = params["wm"].shape[1]
    w1m = params["w1"][:h]                                    # (H, HM)
    w1d = params["w1"][h:]                                    # (H, HM)
    wmT = (params["wm"] @ w1m).T                              # (HM, F)
    wdT = (params["wd"] @ w1d).T                              # (HM, F)
    bT = (params["bm"] @ w1m + params["bd"] @ w1d + params["b1"]).T   # (HM, 1)
    w2t = params["w2"].T                                      # (1, HM)
    simT = sim_data.T                                         # (F, N) VMEM-resident

    scores_row = run_fused_score(m_row, d_row, simT, wmT, wdT, bT, w2t,
                                 params["b2"], tile_e=tile_e)

    # Back to the torch-style (E, 1) association column.
    return scores_row[0, :e].reshape(e, 1)


if __name__ == "__main__":
    # Small deterministic shapes: 64 nodes, 32 similarity features, 32-dim
    # embeddings, 16-dim MLP hidden, 200 training edges (2-step edge grid
    # with padding at tile_e=128).
    N, F, H, HM, E = 64, 32, 32, 16, 200

    key = jax.random.PRNGKey(0)
    ks = jax.random.split(key, 8)

    sim_data = jax.random.normal(ks[0], (N, F), dtype=jnp.float32)
    m_idx = jax.random.randint(ks[1], (E,), 0, N, dtype=jnp.int32)
    d_idx = jax.random.randint(ks[2], (E,), 0, N, dtype=jnp.int32)
    train_data = jnp.stack([m_idx, d_idx], axis=1)            # [E, 2] like torch

    params = {
        "wm": jax.random.normal(ks[3], (F, H), dtype=jnp.float32) * 0.1,
        "bm": jax.random.normal(ks[7], (1, H), dtype=jnp.float32) * 0.01,
        "wd": jax.random.normal(ks[4], (F, H), dtype=jnp.float32) * 0.1,
        "bd": jnp.zeros((1, H), dtype=jnp.float32),
        "w1": jax.random.normal(ks[5], (2 * H, HM), dtype=jnp.float32) * 0.1,
        "b1": jnp.zeros((1, HM), dtype=jnp.float32),
        "w2": jax.random.normal(ks[6], (HM, 1), dtype=jnp.float32) * 0.1,
        "b2": jnp.zeros((1, 1), dtype=jnp.float32),
    }

    out = amhmda_forward(sim_data, train_data, params)
    jax.block_until_ready(out)

    # Pure-JAX reference, structured exactly like the PyTorch module:
    # full-node encoders -> pro_data gather -> concat MLP -> sigmoid.
    em_ref = sim_data @ params["wm"] + params["bm"]
    ed_ref = sim_data @ params["wd"] + params["bd"]
    edge = train_data.T
    mf = jnp.take(em_ref, edge[0], axis=0)
    df = jnp.take(ed_ref, edge[1], axis=0)
    feat = jnp.concatenate([mf, df], axis=-1)
    ref = jax.nn.sigmoid(
        jnp.maximum(feat @ params["w1"] + params["b1"], 0.0) @ params["w2"]
        + params["b2"]
    )

    assert out.shape == (E, 1)
    assert jnp.allclose(out, ref, atol=1e-4, rtol=1e-4), "mismatch vs JAX reference"

    print("KERNEL_OK")
</pallas_src>

<mosaic_0001>
module attributes {stable_mosaic.version = 11 : i64} {
  func.func @fused_score_kernel(%arg0: i32, %arg1: memref<1x128xi32, #tpu.memory_space<vmem>>, %arg2: memref<1x128xi32, #tpu.memory_space<vmem>>, %arg3: memref<32x64xf32, #tpu.memory_space<vmem>>, %arg4: memref<16x32xf32, #tpu.memory_space<vmem>>, %arg5: memref<16x32xf32, #tpu.memory_space<vmem>>, %arg6: memref<16x1xf32, #tpu.memory_space<vmem>>, %arg7: memref<1x16xf32, #tpu.memory_space<vmem>>, %arg8: memref<1x1xf32, #tpu.memory_space<smem>>, %arg9: memref<1x128xf32, #tpu.memory_space<vmem>>) attributes {dimension_semantics = [#tpu.dimension_semantics<parallel>], iteration_bounds = array<i64: 2>, scalar_prefetch = 0 : i64, scratch_operands = 0 : i64, tpu.core_type = #tpu.core_type<tc>, window_params = [{transform_indices = @transform_0, window_bounds = array<i64: 1, 128>}, {transform_indices = @transform_1, window_bounds = array<i64: 1, 128>}, {pipeline_mode = #tpu.pipeline_mode<synchronous>, transform_indices = @transform_2, window_bounds = array<i64: 32, 64>}, {pipeline_mode = #tpu.pipeline_mode<synchronous>, transform_indices = @transform_3, window_bounds = array<i64: 16, 32>}, {pipeline_mode = #tpu.pipeline_mode<synchronous>, transform_indices = @transform_4, window_bounds = array<i64: 16, 32>}, {pipeline_mode = #tpu.pipeline_mode<synchronous>, transform_indices = @transform_5, window_bounds = array<i64: 16, 1>}, {pipeline_mode = #tpu.pipeline_mode<synchronous>, transform_indices = @transform_6, window_bounds = array<i64: 1, 16>}, {transform_indices = @transform_7, window_bounds = array<i64: 1, 1>}, {transform_indices = @transform_8, window_bounds = array<i64: 1, 128>}]} {
    %0 = tpu.iota {dimensions = array<i32: 0>} : vector<64x128xi32>
    %c0 = arith.constant 0 : index
    %c0_0 = arith.constant 0 : index
    %1 = vector.load %arg1[%c0, %c0_0] : memref<1x128xi32, #tpu.memory_space<vmem>>, vector<1x128xi32>
    %2 = vector.broadcast %1 : vector<1x128xi32> to vector<64x128xi32>
    %3 = arith.cmpi eq, %0, %2 : vector<64x128xi32>
    %4 = arith.extui %3 : vector<64x128xi1> to vector<64x128xi32>
    %5 = arith.sitofp %4 : vector<64x128xi32> to vector<64x128xf32>
    %c0_1 = arith.constant 0 : index
    %c0_2 = arith.constant 0 : index
    %6 = vector.load %arg2[%c0_1, %c0_2] : memref<1x128xi32, #tpu.memory_space<vmem>>, vector<1x128xi32>
    %7 = vector.broadcast %6 : vector<1x128xi32> to vector<64x128xi32>
    %8 = arith.cmpi eq, %0, %7 : vector<64x128xi32>
    %9 = arith.extui %8 : vector<64x128xi1> to vector<64x128xi32>
    %10 = arith.sitofp %9 : vector<64x128xi32> to vector<64x128xf32>
    %c0_3 = arith.constant 0 : index
    %c0_4 = arith.constant 0 : index
    %11 = vector.load %arg3[%c0_3, %c0_4] : memref<32x64xf32, #tpu.memory_space<vmem>>, vector<32x64xf32>
    %cst = arith.constant dense<0.000000e+00> : vector<32x128xf32>
    %12 = tpu.matmul %11, %5, %cst {dimension_numbers = #tpu.dot_dimension_numbers<[1], [0], [0], [1], [0, 0, 1, 1], [], []>} : vector<32x64xf32>, vector<64x128xf32>, vector<32x128xf32> -> vector<32x128xf32>
    %c0_5 = arith.constant 0 : index
    %c0_6 = arith.constant 0 : index
    %13 = vector.load %arg3[%c0_5, %c0_6] : memref<32x64xf32, #tpu.memory_space<vmem>>, vector<32x64xf32>
    %cst_7 = arith.constant dense<0.000000e+00> : vector<32x128xf32>
    %14 = tpu.matmul %13, %10, %cst_7 {dimension_numbers = #tpu.dot_dimension_numbers<[1], [0], [0], [1], [0, 0, 1, 1], [], []>} : vector<32x64xf32>, vector<64x128xf32>, vector<32x128xf32> -> vector<32x128xf32>
    %c0_8 = arith.constant 0 : index
    %c0_9 = arith.constant 0 : index
    %15 = vector.load %arg4[%c0_8, %c0_9] : memref<16x32xf32, #tpu.memory_space<vmem>>, vector<16x32xf32>
    %cst_10 = arith.constant dense<0.000000e+00> : vector<16x128xf32>
    %16 = tpu.matmul %15, %12, %cst_10 {dimension_numbers = #tpu.dot_dimension_numbers<[1], [0], [0], [1], [0, 0, 1, 1], [], []>} : vector<16x32xf32>, vector<32x128xf32>, vector<16x128xf32> -> vector<16x128xf32>
    %c0_11 = arith.constant 0 : index
    %c0_12 = arith.constant 0 : index
    %17 = vector.load %arg5[%c0_11, %c0_12] : memref<16x32xf32, #tpu.memory_space<vmem>>, vector<16x32xf32>
    %cst_13 = arith.constant dense<0.000000e+00> : vector<16x128xf32>
    %18 = tpu.matmul %17, %14, %cst_13 {dimension_numbers = #tpu.dot_dimension_numbers<[1], [0], [0], [1], [0, 0, 1, 1], [], []>} : vector<16x32xf32>, vector<32x128xf32>, vector<16x128xf32> -> vector<16x128xf32>
    %19 = arith.addf %16, %18 : vector<16x128xf32>
    %c0_14 = arith.constant 0 : index
    %c0_15 = arith.constant 0 : index
    %20 = vector.load %arg6[%c0_14, %c0_15] : memref<16x1xf32, #tpu.memory_space<vmem>>, vector<16x1xf32>
    %21 = vector.broadcast %20 : vector<16x1xf32> to vector<16x128xf32>
    %22 = arith.addf %19, %21 : vector<16x128xf32>
    %cst_16 = arith.constant 0.000000e+00 : f32
    %23 = vector.broadcast %cst_16 : f32 to vector<16x128xf32>
    %24 = arith.maximumf %22, %23 : vector<16x128xf32>
    %c0_17 = arith.constant 0 : index
    %c0_18 = arith.constant 0 : index
    %25 = vector.load %arg7[%c0_17, %c0_18] : memref<1x16xf32, #tpu.memory_space<vmem>>, vector<1x16xf32>
    %cst_19 = arith.constant dense<0.000000e+00> : vector<1x128xf32>
    %26 = tpu.matmul %25, %24, %cst_19 {dimension_numbers = #tpu.dot_dimension_numbers<[1], [0], [0], [1], [0, 0, 1, 1], [], []>} : vector<1x16xf32>, vector<16x128xf32>, vector<1x128xf32> -> vector<1x128xf32>
    %c0_20 = arith.constant 0 : index
    %c0_21 = arith.constant 0 : index
    %27 = memref.load %arg8[%c0_20, %c0_21] : memref<1x1xf32, #tpu.memory_space<smem>>
    %28 = vector.broadcast %27 : f32 to vector<1x128xf32>
    %29 = arith.addf %26, %28 : vector<1x128xf32>
    %30 = arith.negf %29 : vector<1x128xf32>
    %31 = math.exp %30 : vector<1x128xf32>
    %cst_22 = arith.constant 1.000000e+00 : f32
    %32 = vector.broadcast %cst_22 : f32 to vector<1x128xf32>
    %33 = arith.addf %32, %31 : vector<1x128xf32>
    %34 = arith.divf %32, %33 : vector<1x128xf32>
    %c0_23 = arith.constant 0 : index
    %c0_24 = arith.constant 0 : index
    %35 = vector.load %arg9[%c0_23, %c0_24] : memref<1x128xf32, #tpu.memory_space<vmem>>, vector<1x128xf32>
    tpu.vector_store %arg9[%c0_23, %c0_24], %34 {strides = array<i32>} : memref<1x128xf32, #tpu.memory_space<vmem>>, vector<1x128xf32>,
    return
  }
  func.func @transform_0(%arg0: i32) -> (i32, i32) {
    %c0_i32 = arith.constant 0 : i32
    %c0_i32_0 = arith.constant 0 : i32
    return %c0_i32, %arg0 : i32, i32
  }
  func.func @transform_1(%arg0: i32) -> (i32, i32) {
    %c0_i32 = arith.constant 0 : i32
    %c0_i32_0 = arith.constant 0 : i32
    return %c0_i32, %arg0 : i32, i32
  }
  func.func @transform_2(%arg0: i32) -> (i32, i32) {
    %c0_i32 = arith.constant 0 : i32
    %c0_i32_0 = arith.constant 0 : i32
    %c0_i32_1 = arith.constant 0 : i32
    return %c0_i32, %c0_i32_0 : i32, i32
  }
  func.func @transform_3(%arg0: i32) -> (i32, i32) {
    %c0_i32 = arith.constant 0 : i32
    %c0_i32_0 = arith.constant 0 : i32
    %c0_i32_1 = arith.constant 0 : i32
    return %c0_i32, %c0_i32_0 : i32, i32
  }
  func.func @transform_4(%arg0: i32) -> (i32, i32) {
    %c0_i32 = arith.constant 0 : i32
    %c0_i32_0 = arith.constant 0 : i32
    %c0_i32_1 = arith.constant 0 : i32
    return %c0_i32, %c0_i32_0 : i32, i32
  }
  func.func @transform_5(%arg0: i32) -> (i32, i32) {
    %c0_i32 = arith.constant 0 : i32
    %c0_i32_0 = arith.constant 0 : i32
    %c0_i32_1 = arith.constant 0 : i32
    return %c0_i32, %c0_i32_0 : i32, i32
  }
  func.func @transform_6(%arg0: i32) -> (i32, i32) {
    %c0_i32 = arith.constant 0 : i32
    %c0_i32_0 = arith.constant 0 : i32
    %c0_i32_1 = arith.constant 0 : i32
    return %c0_i32, %c0_i32_0 : i32, i32
  }
  func.func @transform_7(%arg0: i32) -> (i32, i32) {
    %c0_i32 = arith.constant 0 : i32
    %c0_i32_0 = arith.constant 0 : i32
    %c0_i32_1 = arith.constant 0 : i32
    return %c0_i32, %c0_i32_0 : i32, i32
  }
  func.func @transform_8(%arg0: i32) -> (i32, i32) {
    %c0_i32 = arith.constant 0 : i32
    %c0_i32_0 = arith.constant 0 : i32
    return %c0_i32, %arg0 : i32, i32
  }
}

</mosaic_0001>

<llo_original>
// kernel: tpu_custom_call.1
$region0: #{tpu_custom_call.1}
  #allocation0 [shape = 'u32[]', space=smem, size = 0x4, offset = 0x4, fixed_abs, tag = 'smem constant byte address 0x4 - core index']
  #allocation1 [shape = 'u32[144,128]{1,0:T(1,128)}', space=vmem, size = 0x12000, scoped, tag = 'internal scratch']
  #allocation2 [shape = 'f32[1,1]{1,0:T(1,128)S(6)}', space=smem, size = 0x200, scoped, tag = 'scoped memory for tpu_custom_call.1']
  %s0 = inlined_call_operand.hbm [shape: s32[1,256], index: 0, kind: input, shape index: {}]
  %s1 = inlined_call_operand.hbm [shape: s32[1,256], index: 1, kind: input, shape index: {}]
  %s2 = inlined_call_operand.hbm [shape: f32[32,64], index: 2, kind: input, shape index: {}]
  %s3 = inlined_call_operand.vmem [shape: f32[16,32], index: 3, kind: input, shape index: {}]
  %s4 = inlined_call_operand.vmem [shape: f32[16,32], index: 4, kind: input, shape index: {}]
  %s5 = inlined_call_operand.vmem [shape: f32[16,1], index: 5, kind: input, shape index: {}]
  %s6 = inlined_call_operand.vmem [shape: f32[1,16], index: 6, kind: input, shape index: {}]
  %s7 = inlined_call_operand.<no memory space> [shape: f32[1,1], index: 7, kind: input, shape index: {}]
  %s8 = inlined_call_operand.hbm [shape: f32[1,256], index: 8, kind: output, shape index: {}]
  %s9 = sld [smem:[#allocation0]]
  $region77: #{tpu_custom_call.1} parent=0
    _
  %s11 = ssub.s32 1, %s9
  %s12 = scalar_select 0, %s11, %s9
  %13 = sst [smem:[#allocation2]] %s7
  $region1: #{tpu_custom_call.1} parent=0
    #allocation3 [shape = 'u8[1024]{0}', space=vmem, size = 0x400, scoped, tag = 'input window, operand 0']
    #allocation4 [shape = 's32[2]{0}', space=sflag, size = 0x8, scoped, tag = 'scoped memory for tpu_custom_call.1']
    #allocation5 [shape = 's32[2]{0}', space=sflag, size = 0x8, scoped, tag = 'scoped memory for tpu_custom_call.1']
    #allocation6 [shape = 'u8[1024]{0}', space=vmem, size = 0x400, scoped, tag = 'input window, operand 1']
    #allocation7 [shape = 's32[2]{0}', space=sflag, size = 0x8, scoped, tag = 'scoped memory for tpu_custom_call.1']
    #allocation8 [shape = 'u8[16384]{0}', space=vmem, size = 0x4000, scoped, tag = 'input window, operand 2, single buffered']
    #allocation9 [shape = 'u8[1024]{0}', space=vmem, size = 0x400, scoped, tag = 'output window, operand 0']
    %14 = vsyncpa [#allocation4], 0
    %s15 = scalar_lea.sflag [#allocation4], 1
    %16 = vsyncpa %s15, 0
    %17 = vsyncpa [#allocation7], 0
    %s18 = scalar_lea.sflag [#allocation7], 1
    %19 = vsyncpa %s18, 0
    %20 = vsyncpa [#allocation5], 0
    %s21 = scalar_lea.sflag [#allocation5], 1
    %22 = vsyncpa %s21, 0
    loop: start=0, step=1, limit=4
    $region2: #{tpu_custom_call.1} parent=1 // loop_pre_header
      _
    $region3: #{tpu_custom_call.1} parent=1 // loop_header
      %s24 = sphi 0, %s28
      %p25 = scmp.ge.s32.totalorder %s24, 4
      %s34 = sphi 0, %s36
      %s37 = sphi 0, %s34
      %s38 = sphi 0, %s37
      %s54 = sphi 0, %s38
      %s60 = sphi 0, %s62
      %s63 = sphi 0, %s60
      %s64 = sphi 0, %s63
      %s80 = sphi 0, %s64
      %s84 = sphi 0, %s84
      %s86 = sphi 0, %s84
      %s87 = sphi 0, %s86
      %s101 = sphi 0, %s87
      %s105 = sphi 0, %s105
      %s107 = sphi 0, %s105
      %s108 = sphi 0, %s107
      %s122 = sphi 0, %s108
      %s126 = sphi 0, %s126
      %s128 = sphi 0, %s126
      %s129 = sphi 0, %s128
      %s143 = sphi 0, %s129
      %s147 = sphi 0, %s147
      %s149 = sphi 0, %s147
      %s150 = sphi 0, %s149
      %s164 = sphi 0, %s150
      %s168 = sphi 0, %s168
      %s170 = sphi 0, %s168
      %s171 = sphi 0, %s170
      %s185 = sphi 0, %s171
      %s189 = sphi 0, %s189
      %s191 = sphi 0, %s189
      %s192 = sphi 0, %s191
      %s206 = sphi 0, %s192
      %s212 = sphi 0, %s214
      %s215 = sphi 0, %s212
      %s216 = sphi 0, %s215
      %s232 = sphi 0, %s216
    $region4: #{tpu_custom_call.1} parent=1 // loop_header_branch
      %27 = sbr.rel (%p25) target = $region8
    $region5: #{tpu_custom_call.1} parent=1 // loop_body
      %s29 = ssub.s32 %s24, 1
      %s30 = ssub.s32 %s24, 2
      %s31 = sadd.s32 %s24, 1
      %s32 = ssub.s32 %s24, %s31
      %p33 = scmp.eq.s32.totalorder %s32, 0
      %s35 = sadd.s32 %s34, 1
      %s36 = scalar_select %p33, %s34, %s35
      %p39 = pneg %p33
      %p40 = scmp.eq.s32.totalorder %s24, 1
      %p41 = por %p39, %p40
      %p42 = scmp.ne.s32.totalorder %s34, %s37
      %p43 = scmp.eq.s32.totalorder %s24, 0
      %p44 = por %p42, %p43
      %p45 = scmp.ne.s32.totalorder %s34, %s37
      %p46 = scmp.eq.s32.totalorder %s29, 1
      %p47 = por %p45, %p46
      %p48 = scmp.ne.s32.totalorder %s37, %s38
      %p49 = scmp.eq.s32.totalorder %s29, 0
      %p50 = por %p48, %p49
      %p51 = scmp.ne.s32.totalorder %s37, %s38
      %p52 = scmp.eq.s32.totalorder %s30, 1
      %p53 = por %p51, %p52
      %p55 = scmp.ne.s32.totalorder %s38, %s54
      %p56 = scmp.eq.s32.totalorder %s30, 0
      %p57 = por %p55, %p56
      %s58 = ssub.s32 %s24, %s31
      %p59 = scmp.eq.s32.totalorder %s58, 0
      %s61 = sadd.s32 %s60, 1
      %s62 = scalar_select %p59, %s60, %s61
      %p65 = pneg %p59
      %p66 = scmp.eq.s32.totalorder %s24, 1
      %p67 = por %p65, %p66
      %p68 = scmp.ne.s32.totalorder %s60, %s63
      %p69 = scmp.eq.s32.totalorder %s24, 0
      %p70 = por %p68, %p69
      %p71 = scmp.ne.s32.totalorder %s60, %s63
      %p72 = scmp.eq.s32.totalorder %s29, 1
      %p73 = por %p71, %p72
      %p74 = scmp.ne.s32.totalorder %s63, %s64
      %p75 = scmp.eq.s32.totalorder %s29, 0
      %p76 = por %p74, %p75
      %p77 = scmp.ne.s32.totalorder %s63, %s64
      %p78 = scmp.eq.s32.totalorder %s30, 1
      %p79 = por %p77, %p78
      %p81 = scmp.ne.s32.totalorder %s64, %s80
      %p82 = scmp.eq.s32.totalorder %s30, 0
      %p83 = por %p81, %p82
      %s85 = sadd.s32 %s84, 1
      %p88 = scmp.eq.s32.totalorder %s24, 1
      %p89 = scmp.ne.s32.totalorder %s84, %s86
      %p90 = scmp.eq.s32.totalorder %s24, 0
      %p91 = por %p89, %p90
      %p92 = scmp.ne.s32.totalorder %s84, %s86
      %p93 = scmp.eq.s32.totalorder %s29, 1
      %p94 = por %p92, %p93
      %p95 = scmp.ne.s32.totalorder %s86, %s87
      %p96 = scmp.eq.s32.totalorder %s29, 0
      %p97 = por %p95, %p96
      %p98 = scmp.ne.s32.totalorder %s86, %s87
      %p99 = scmp.eq.s32.totalorder %s30, 1
      %p100 = por %p98, %p99
      %p102 = scmp.ne.s32.totalorder %s87, %s101
      %p103 = scmp.eq.s32.totalorder %s30, 0
      %p104 = por %p102, %p103
      %s106 = sadd.s32 %s105, 1
      %p109 = scmp.eq.s32.totalorder %s24, 1
      %p110 = scmp.ne.s32.totalorder %s105, %s107
      %p111 = scmp.eq.s32.totalorder %s24, 0
      %p112 = por %p110, %p111
      %p113 = scmp.ne.s32.totalorder %s105, %s107
      %p114 = scmp.eq.s32.totalorder %s29, 1
      %p115 = por %p113, %p114
      %p116 = scmp.ne.s32.totalorder %s107, %s108
      %p117 = scmp.eq.s32.totalorder %s29, 0
      %p118 = por %p116, %p117
      %p119 = scmp.ne.s32.totalorder %s107, %s108
      %p120 = scmp.eq.s32.totalorder %s30, 1
      %p121 = por %p119, %p120
      %p123 = scmp.ne.s32.totalorder %s108, %s122
      %p124 = scmp.eq.s32.totalorder %s30, 0
      %p125 = por %p123, %p124
      %s127 = sadd.s32 %s126, 1
      %p130 = scmp.eq.s32.totalorder %s24, 1
      %p131 = scmp.ne.s32.totalorder %s126, %s128
      %p132 = scmp.eq.s32.totalorder %s24, 0
      %p133 = por %p131, %p132
      %p134 = scmp.ne.s32.totalorder %s126, %s128
      %p135 = scmp.eq.s32.totalorder %s29, 1
      %p136 = por %p134, %p135
      %p137 = scmp.ne.s32.totalorder %s128, %s129
      %p138 = scmp.eq.s32.totalorder %s29, 0
      %p139 = por %p137, %p138
      %p140 = scmp.ne.s32.totalorder %s128, %s129
      %p141 = scmp.eq.s32.totalorder %s30, 1
      %p142 = por %p140, %p141
      %p144 = scmp.ne.s32.totalorder %s129, %s143
      %p145 = scmp.eq.s32.totalorder %s30, 0
      %p146 = por %p144, %p145
      %s148 = sadd.s32 %s147, 1
      %p151 = scmp.eq.s32.totalorder %s24, 1
      %p152 = scmp.ne.s32.totalorder %s147, %s149
      %p153 = scmp.eq.s32.totalorder %s24, 0
      %p154 = por %p152, %p153
      %p155 = scmp.ne.s32.totalorder %s147, %s149
      %p156 = scmp.eq.s32.totalorder %s29, 1
      %p157 = por %p155, %p156
      %p158 = scmp.ne.s32.totalorder %s149, %s150
      %p159 = scmp.eq.s32.totalorder %s29, 0
      %p160 = por %p158, %p159
      %p161 = scmp.ne.s32.totalorder %s149, %s150
      %p162 = scmp.eq.s32.totalorder %s30, 1
      %p163 = por %p161, %p162
      %p165 = scmp.ne.s32.totalorder %s150, %s164
      %p166 = scmp.eq.s32.totalorder %s30, 0
      %p167 = por %p165, %p166
      %s169 = sadd.s32 %s168, 1
      %p172 = scmp.eq.s32.totalorder %s24, 1
      %p173 = scmp.ne.s32.totalorder %s168, %s170
      %p174 = scmp.eq.s32.totalorder %s24, 0
      %p175 = por %p173, %p174
      %p176 = scmp.ne.s32.totalorder %s168, %s170
      %p177 = scmp.eq.s32.totalorder %s29, 1
      %p178 = por %p176, %p177
      %p179 = scmp.ne.s32.totalorder %s170, %s171
      %p180 = scmp.eq.s32.totalorder %s29, 0
      %p181 = por %p179, %p180
      %p182 = scmp.ne.s32.totalorder %s170, %s171
      %p183 = scmp.eq.s32.totalorder %s30, 1
      %p184 = por %p182, %p183
      %p186 = scmp.ne.s32.totalorder %s171, %s185
      %p187 = scmp.eq.s32.totalorder %s30, 0
      %p188 = por %p186, %p187
      %s190 = sadd.s32 %s189, 1
      %p193 = scmp.eq.s32.totalorder %s24, 1
      %p194 = scmp.ne.s32.totalorder %s189, %s191
      %p195 = scmp.eq.s32.totalorder %s24, 0
      %p196 = por %p194, %p195
      %p197 = scmp.ne.s32.totalorder %s189, %s191
      %p198 = scmp.eq.s32.totalorder %s29, 1
      %p199 = por %p197, %p198
      %p200 = scmp.ne.s32.totalorder %s191, %s192
      %p201 = scmp.eq.s32.totalorder %s29, 0
      %p202 = por %p200, %p201
      %p203 = scmp.ne.s32.totalorder %s191, %s192
      %p204 = scmp.eq.s32.totalorder %s30, 1
      %p205 = por %p203, %p204
      %p207 = scmp.ne.s32.totalorder %s192, %s206
      %p208 = scmp.eq.s32.totalorder %s30, 0
      %p209 = por %p207, %p208
      %s210 = ssub.s32 %s24, %s31
      %p211 = scmp.eq.s32.totalorder %s210, 0
      %s213 = sadd.s32 %s212, 1
      %s214 = scalar_select %p211, %s212, %s213
      %p217 = pneg %p211
      %p218 = scmp.eq.s32.totalorder %s24, 1
      %p219 = por %p217, %p218
      %p220 = scmp.ne.s32.totalorder %s212, %s215
      %p221 = scmp.eq.s32.totalorder %s24, 0
      %p222 = por %p220, %p221
      %p223 = scmp.ne.s32.totalorder %s212, %s215
      %p224 = scmp.eq.s32.totalorder %s29, 1
      %p225 = por %p223, %p224
      %p226 = scmp.ne.s32.totalorder %s215, %s216
      %p227 = scmp.eq.s32.totalorder %s29, 0
      %p228 = por %p226, %p227
      %p229 = scmp.ne.s32.totalorder %s215, %s216
      %p230 = scmp.eq.s32.totalorder %s30, 1
      %p231 = por %p229, %p230
      %p233 = scmp.ne.s32.totalorder %s216, %s232
      %p234 = scmp.eq.s32.totalorder %s30, 0
      %p235 = por %p233, %p234
      %p236 = scmp.le.s32.totalorder 1, %s24
      %p237 = scmp.lt.s32.totalorder %s24, 3
      %p238 = pnand %p236, %p237
      %p239 = pneg %p238
      // Predicated region
      $region9: #{tpu_custom_call.1} parent=5 // pred_check
        _
      $region10: #{tpu_custom_call.1} parent=5 // pred_check_branch
        %241 = sbr.rel (%p238) target = $region12
      $region11: #{tpu_custom_call.1} parent=5 // pred_region
        %s242 = ssub.s32 %s24, 1
        // Predicated region
        $region13: #{tpu_custom_call.1} parent=11 // pred_check
          %p243 = pneg %p97
        $region14: #{tpu_custom_call.1} parent=11 // pred_check_branch
          %245 = sbr.rel (%p243) target = $region16
        $region15: #{tpu_custom_call.1} parent=11 // pred_region
          %s247 = ssub.s32 512, 512
          %248 = vsyncadd [#allocation7], %s247
          %s249 = sshll.u32 [#allocation8], 4
          %s250 = int_to_ptr.vmem [resolvable:$true] %s249
          %255 = dma.hbm_to_vmem [thread:$0]  %s2, 512, %s250, [#allocation7], 128, 128, 8
        $region16: #{tpu_custom_call.1} parent=11 // pred_fallthru
          _
        // Predicated region
        $region17: #{tpu_custom_call.1} parent=11 // pred_check
          %p256 = pneg %p118
        $region18: #{tpu_custom_call.1} parent=11 // pred_check_branch
          %258 = sbr.rel (%p256) target = $region20
        $region19: #{tpu_custom_call.1} parent=11 // pred_region
          _
        $region20: #{tpu_custom_call.1} parent=11 // pred_fallthru
          _
        // Predicated region
        $region21: #{tpu_custom_call.1} parent=11 // pred_check
          %p259 = pneg %p139
        $region22: #{tpu_custom_call.1} parent=11 // pred_check_branch
          %261 = sbr.rel (%p259) target = $region24
        $region23: #{tpu_custom_call.1} parent=11 // pred_region
          _
        $region24: #{tpu_custom_call.1} parent=11 // pred_fallthru
          _
        // Predicated region
        $region25: #{tpu_custom_call.1} parent=11 // pred_check
          %p262 = pneg %p160
        $region26: #{tpu_custom_call.1} parent=11 // pred_check_branch
          %264 = sbr.rel (%p262) target = $region28
        $region27: #{tpu_custom_call.1} parent=11 // pred_region
          _
        $region28: #{tpu_custom_call.1} parent=11 // pred_fallthru
          _
        // Predicated region
        $region29: #{tpu_custom_call.1} parent=11 // pred_check
          %p265 = pneg %p181
        $region30: #{tpu_custom_call.1} parent=11 // pred_check_branch
          %267 = sbr.rel (%p265) target = $region32
        $region31: #{tpu_custom_call.1} parent=11 // pred_region
          _
        $region32: #{tpu_custom_call.1} parent=11 // pred_fallthru
          _
        // Predicated region
        $region33: #{tpu_custom_call.1} parent=11 // pred_check
          %p268 = pneg %p202
        $region34: #{tpu_custom_call.1} parent=11 // pred_check_branch
          %270 = sbr.rel (%p268) target = $region36
        $region35: #{tpu_custom_call.1} parent=11 // pred_region
          _
        $region36: #{tpu_custom_call.1} parent=11 // pred_fallthru
          _
      $region12: #{tpu_custom_call.1} parent=5 // pred_fallthru
        _
      %p271 = scmp.lt.s32.totalorder %s24, 2
      // Predicated region
      $region37: #{tpu_custom_call.1} parent=5 // pred_check
        %p272 = pneg %p271
      $region38: #{tpu_custom_call.1} parent=5 // pred_check_branch
        %274 = sbr.rel (%p272) target = $region40
      $region39: #{tpu_custom_call.1} parent=5 // pred_region
        // Predicated region
        $region41: #{tpu_custom_call.1} parent=39 // pred_check
          %p275 = pneg %p44
        $region42: #{tpu_custom_call.1} parent=39 // pred_check_branch
          %277 = sbr.rel (%p275) target = $region44
        $region43: #{tpu_custom_call.1} parent=39 // pred_region
          %s278 = sand.u32 %s34, 1
          %s279 = scalar_lea.sflag [#allocation4], %s278
          %s280 = sand.u32 %s34, 1
          %s281 = scalar_lea.vmem [#allocation3], %s280
          %s283 = ssub.s32 16, 16
          %284 = vsyncadd %s279, %s283
          %s285 = smul.addr %s24, 16
          %s286 = scalar_lea.hbm %s0, %s285
          %s288 = sshll.u32 %s281, 4
          %s289 = int_to_ptr.vmem [resolvable:$true] %s288
          %291 = dma.hbm_to_vmem [thread:$0]  %s286, 16, %s289, %s279
        $region44: #{tpu_custom_call.1} parent=39 // pred_fallthru
          _
        // Predicated region
        $region45: #{tpu_custom_call.1} parent=39 // pred_check
          %p292 = pneg %p70
        $region46: #{tpu_custom_call.1} parent=39 // pred_check_branch
          %294 = sbr.rel (%p292) target = $region48
        $region47: #{tpu_custom_call.1} parent=39 // pred_region
          %s295 = sand.u32 %s24, 1
          %s296 = scalar_lea.sflag [#allocation7], %s295
          %s297 = sand.u32 %s60, 1
          %s298 = scalar_lea.vmem [#allocation6], %s297
          %s300 = ssub.s32 16, 16
          %301 = vsyncadd %s296, %s300
          %s302 = smul.addr %s24, 16
          %s303 = scalar_lea.hbm %s1, %s302
          %s305 = sshll.u32 %s298, 4
          %s306 = int_to_ptr.vmem [resolvable:$true] %s305
          %308 = dma.hbm_to_vmem [thread:$0]  %s303, 16, %s306, %s296
        $region48: #{tpu_custom_call.1} parent=39 // pred_fallthru
          _
      $region40: #{tpu_custom_call.1} parent=5 // pred_fallthru
        _
      %p309 = scmp.le.s32.totalorder 1, %s24
      %p310 = scmp.lt.s32.totalorder %s24, 3
      %p311 = pnand %p309, %p310
      %p312 = pneg %p311
      // Predicated region
      $region49: #{tpu_custom_call.1} parent=5 // pred_check
        _
      $region50: #{tpu_custom_call.1} parent=5 // pred_check_branch
        %314 = sbr.rel (%p311) target = $region52
      $region51: #{tpu_custom_call.1} parent=5 // pred_region
        %s315 = ssub.s32 %s24, 1
        %s316 = sand.u32 %s37, 1
        %s317 = scalar_lea.sflag [#allocation4], %s316
        %s318 = sand.u32 %s37, 1
        %s319 = scalar_lea.vmem [#allocation3], %s318
        // Predicated region
        $region53: #{tpu_custom_call.1} parent=51 // pred_check
          %p320 = pneg %p50
        $region54: #{tpu_custom_call.1} parent=51 // pred_check_branch
          %322 = sbr.rel (%p320) target = $region56
        $region55: #{tpu_custom_call.1} parent=51 // pred_region
          %323 = dma.done %s317, 16
        $region56: #{tpu_custom_call.1} parent=51 // pred_fallthru
          _
        %s324 = sand.u32 %s29, 1
        %s325 = scalar_lea.sflag [#allocation7], %s324
        %s326 = sand.u32 %s63, 1
        %s327 = scalar_lea.vmem [#allocation6], %s326
        // Predicated region
        $region57: #{tpu_custom_call.1} parent=51 // pred_check
          %p328 = pneg %p76
        $region58: #{tpu_custom_call.1} parent=51 // pred_check_branch
          %330 = sbr.rel (%p328) target = $region60
        $region59: #{tpu_custom_call.1} parent=51 // pred_region
          %331 = dma.done %s325, 16
        $region60: #{tpu_custom_call.1} parent=51 // pred_fallthru
          _
        // Predicated region
        $region61: #{tpu_custom_call.1} parent=51 // pred_check
          %p332 = pneg %p97
        $region62: #{tpu_custom_call.1} parent=51 // pred_check_branch
          %334 = sbr.rel (%p332) target = $region64
        $region63: #{tpu_custom_call.1} parent=51 // pred_region
          %335 = dma.done [#allocation7], 512
        $region64: #{tpu_custom_call.1} parent=51 // pred_fallthru
          _
        %s336 = sand.u32 %s37, 1
        %s337 = scalar_lea.sflag [#allocation4], %s336
        %s338 = sand.u32 %s37, 1
        %s339 = scalar_lea.vmem [#allocation3], %s338
        %p340 = pneg %p50
        %p341 = pneg %p47
        %s342 = sand.u32 %s29, 1
        %s343 = scalar_lea.sflag [#allocation7], %s342
        %s344 = sand.u32 %s63, 1
        %s345 = scalar_lea.vmem [#allocation6], %s344
        %p346 = pneg %p76
        %p347 = pneg %p73
        %p348 = pneg %p97
        %p349 = pneg %p94
        %p350 = pneg %p118
        %p351 = pneg %p115
        %p352 = pneg %p139
        %p353 = pneg %p136
        %p354 = pneg %p160
        %p355 = pneg %p157
        %p356 = pneg %p181
        %p357 = pneg %p178
        %p358 = pneg %p202
        %p359 = pneg %p199
        %p360 = pneg %p228
        %p361 = pneg %p225
        %s362 = sand.u32 %s215, 1
        %s363 = scalar_lea.sflag [#allocation5], %s362
        %s364 = sand.u32 %s215, 1
        %s365 = scalar_lea.vmem [#allocation9], %s364
        %v366 = vlaneseq
        %v367 = vshrl.u32 %v366, 7
        %v368 = vadd.s32 %v367, 8
        %v369 = vadd.s32 %v367, 16
        %v370 = vadd.s32 %v367, 24
        %v371 = vadd.s32 %v367, 32
        %v372 = vadd.s32 %v367, 40
        %v373 = vadd.s32 %v367, 48
        %v374 = vadd.s32 %v367, 56
        %v375 = vld [vmem:[%s319] sm:$0x1]
        %v376 = vlaneseq
        %v377 = vshrl.u32 %v376, 7
        %v378 = vsub.s32 0, %v377
        %v379 = vrot.slane %v375, %v378
        %vm380 = vcmp.eq.s32.totalorder %v367, %v379
        %vm381 = vcmp.eq.s32.totalorder %v368, %v379
        %vm382 = vcmp.eq.s32.totalorder %v369, %v379
        %vm383 = vcmp.eq.s32.totalorder %v370, %v379
        %vm384 = vcmp.eq.s32.totalorder %v371, %v379
        %vm385 = vcmp.eq.s32.totalorder %v372, %v379
        %vm386 = vcmp.eq.s32.totalorder %v373, %v379
        %vm387 = vcmp.eq.s32.totalorder %v374, %v379
        %v388 = vsel %vm380, 1, 0
        %v389 = vsel %vm381, 1, 0
        %v390 = vsel %vm382, 1, 0
        %v391 = vsel %vm383, 1, 0
        %v392 = vsel %vm384, 1, 0
        %v393 = vsel %vm385, 1, 0
        %v394 = vsel %vm386, 1, 0
        %v395 = vsel %vm387, 1, 0
        %v396 = vcvt.s32.f32 %v388
        %v397 = vcvt.s32.f32 %v389
        %v398 = vcvt.s32.f32 %v390
        %v399 = vcvt.s32.f32 %v391
        %v400 = vcvt.s32.f32 %v392
        %v401 = vcvt.s32.f32 %v393
        %v402 = vcvt.s32.f32 %v394
        %v403 = vcvt.s32.f32 %v395
        %v404 = vld [vmem:[%s327] sm:$0x1]
        %v405 = vlaneseq
        %v406 = vshrl.u32 %v405, 7
        %v407 = vsub.s32 0, %v406
        %v408 = vrot.slane %v404, %v407
        %vm409 = vcmp.eq.s32.totalorder %v367, %v408
        %vm410 = vcmp.eq.s32.totalorder %v368, %v408
        %vm411 = vcmp.eq.s32.totalorder %v369, %v408
        %vm412 = vcmp.eq.s32.totalorder %v370, %v408
        %vm413 = vcmp.eq.s32.totalorder %v371, %v408
        %vm414 = vcmp.eq.s32.totalorder %v372, %v408
        %vm415 = vcmp.eq.s32.totalorder %v373, %v408
        %vm416 = vcmp.eq.s32.totalorder %v374, %v408
        %v417 = vsel %vm409, 1, 0
        %v418 = vsel %vm410, 1, 0
        %v419 = vsel %vm411, 1, 0
        %v420 = vsel %vm412, 1, 0
        %v421 = vsel %vm413, 1, 0
        %v422 = vsel %vm414, 1, 0
        %v423 = vsel %vm415, 1, 0
        %v424 = vsel %vm416, 1, 0
        %v425 = vcvt.s32.f32 %v417
        %v426 = vcvt.s32.f32 %v418
        %v427 = vcvt.s32.f32 %v419
        %v428 = vcvt.s32.f32 %v420
        %v429 = vcvt.s32.f32 %v421
        %v430 = vcvt.s32.f32 %v422
        %v431 = vcvt.s32.f32 %v423
        %v432 = vcvt.s32.f32 %v424
        %v433 = vld [vmem:[#allocation8] sm:$0xff]
        %v434 = vld [vmem:[#allocation8 + $0x8] sm:$0xff]
        %v435 = vld [vmem:[#allocation8 + $0x10] sm:$0xff]
        %v436 = vld [vmem:[#allocation8 + $0x18] sm:$0xff]
        %vm437 = vcmask 523264
        %v439 = vsel %vm437, %v433, 0
        %v442 = vsel %vm437, %v434, 0
        %v445 = vsel %vm437, %v435, 0
        %v448 = vsel %vm437, %v436, 0
        %450 = vmatprep.subr.mxu0 0.0
        %451 = vmatpush1.msra.mxu0 %v396
        %452 = vmatprep.subr.mxu0 0.0
        %453 = vmatpush1.msra.mxu0 %v397
        %454 = vmatprep.subr.mxu0 0.0
        %455 = vmatpush1.msra.mxu0 %v398
        %456 = vmatprep.subr.mxu0 0.0
        %457 = vmatpush1.msra.mxu0 %v399
        %458 = vmatprep.subr.mxu0 0.0
        %459 = vmatpush1.msra.mxu0 %v400
        %460 = vmatprep.subr.mxu0 0.0
        %461 = vmatpush1.msra.mxu0 %v401
        %462 = vmatprep.subr.mxu0 0.0
        %463 = vmatpush1.msra.mxu0 %v402
        %464 = vmatprep.subr.mxu0 0.0
        %465 = vmatpush1.msra.mxu0 %v403
        %466 = vmatprep.subr.mxu0 0.0
        %467 = vmatpush1.msra.mxu0 0.0
        %468 = vmatprep.subr.mxu0 0.0
        %469 = vmatpush1.msra.mxu0 0.0
        %470 = vmatprep.subr.mxu0 0.0
        %471 = vmatpush1.msra.mxu0 0.0
        %472 = vmatprep.subr.mxu0 0.0
        %473 = vmatpush1.msra.mxu0 0.0
        %474 = vmatprep.subr.mxu0 0.0
        %475 = vmatpush1.msra.mxu0 0.0
        %476 = vmatprep.subr.mxu0 0.0
        %477 = vmatpush1.msra.mxu0 0.0
        %478 = vmatprep.subr.mxu0 0.0
        %479 = vmatpush1.msra.mxu0 0.0
        %480 = vmatprep.subr.mxu0 0.0
        %481 = vmatpush1.msra.mxu0 0.0
        %482 = vmatprep.subr.mxu0 0.0
        %483 = vmatpush1.msra.mxu0 0.0
        %484 = vmatprep.subr.mxu0 0.0
        %485 = vmatpush1.msra.mxu0 0.0
        %486 = vmatprep.subr.mxu0 0.0
        %487 = vmatpush1.msra.mxu0 0.0
        %488 = vmatprep.subr.mxu0 0.0
        %489 = vmatpush1.msra.mxu0 0.0
        %490 = vmatprep.subr.mxu0 0.0
        %491 = vmatpush1.msra.mxu0 0.0
        %492 = vmatprep.subr.mxu0 0.0
        %493 = vmatpush1.msra.mxu0 0.0
        %494 = vmatprep.subr.mxu0 0.0
        %495 = vmatpush1.msra.mxu0 0.0
        %496 = vmatprep.subr.mxu0 0.0
        %497 = vmatpush1.msra.mxu0 0.0
        %498 = vmatprep.subr.mxu0 0.0
        %499 = vmatpush1.msra.mxu0 0.0
        %500 = vmatprep.subr.mxu0 0.0
        %501 = vmatpush1.msra.mxu0 0.0
        %502 = vmatprep.subr.mxu0 0.0
        %503 = vmatpush1.msra.mxu0 0.0
        %504 = vmatprep.subr.mxu0 0.0
        %505 = vmatpush1.msra.mxu0 0.0
        %506 = vmatprep.subr.mxu0 0.0
        %507 = vmatpush1.msra.mxu0 0.0
        %508 = vmatprep.subr.mxu0 0.0
        %509 = vmatpush1.msra.mxu0 0.0
        %510 = vmatprep.subr.mxu0 0.0
        %511 = vmatpush1.msra.mxu0 0.0
        %512 = vmatprep.subr.mxu0 0.0
        %513 = vmatpush1.msra.mxu0 0.0
        %514 = vmatprep.mubr.f32.mxu0 0.0
        %515 = vmatmul.mubr.f32.gmra.mrb[0].mxu0 %v439
        %v516 = vpop.f32.mrb[0].mxu0
        %v517 = vadd.f32 0.0, %v516
        %v518 = vpop.f32.mrb[0].mxu0
        %519 = vmatprep.mubr.f32.mxu0 0.0
        %520 = vmatmul.mubr.f32.gmra.mrb[0].mxu0 %v442
        %v521 = vpop.f32.mrb[0].mxu0
        %v522 = vadd.f32 0.0, %v521
        %v523 = vpop.f32.mrb[0].mxu0
        %524 = vmatprep.mubr.f32.mxu0 0.0
        %525 = vmatmul.mubr.f32.gmra.mrb[0].mxu0 %v445
        %v526 = vpop.f32.mrb[0].mxu0
        %v527 = vadd.f32 0.0, %v526
        %v528 = vpop.f32.mrb[0].mxu0
        %529 = vmatprep.mubr.f32.mxu0 0.0
        %530 = vmatmul.mubr.f32.gmra.mrb[0].mxu0 %v448
        %v531 = vpop.f32.mrb[0].mxu0
        %v532 = vadd.f32 0.0, %v531
        %v533 = vpop.f32.mrb[0].mxu0
        %534 = vdwg.mxu0
        %535 = vmatprep.subr.mxu0 0.0
        %536 = vmatpush1.msra.mxu0 %v425
        %537 = vmatprep.subr.mxu0 0.0
        %538 = vmatpush1.msra.mxu0 %v426
        %539 = vmatprep.subr.mxu0 0.0
        %540 = vmatpush1.msra.mxu0 %v427
        %541 = vmatprep.subr.mxu0 0.0
        %542 = vmatpush1.msra.mxu0 %v428
        %543 = vmatprep.subr.mxu0 0.0
        %544 = vmatpush1.msra.mxu0 %v429
        %545 = vmatprep.subr.mxu0 0.0
        %546 = vmatpush1.msra.mxu0 %v430
        %547 = vmatprep.subr.mxu0 0.0
        %548 = vmatpush1.msra.mxu0 %v431
        %549 = vmatprep.subr.mxu0 0.0
        %550 = vmatpush1.msra.mxu0 %v432
        %551 = vmatprep.subr.mxu0 0.0
        %552 = vmatpush1.msra.mxu0 0.0
        %553 = vmatprep.subr.mxu0 0.0
        %554 = vmatpush1.msra.mxu0 0.0
        %555 = vmatprep.subr.mxu0 0.0
        %556 = vmatpush1.msra.mxu0 0.0
        %557 = vmatprep.subr.mxu0 0.0
        %558 = vmatpush1.msra.mxu0 0.0
        %559 = vmatprep.subr.mxu0 0.0
        %560 = vmatpush1.msra.mxu0 0.0
        %561 = vmatprep.subr.mxu0 0.0
        %562 = vmatpush1.msra.mxu0 0.0
        %563 = vmatprep.subr.mxu0 0.0
        %564 = vmatpush1.msra.mxu0 0.0
        %565 = vmatprep.subr.mxu0 0.0
        %566 = vmatpush1.msra.mxu0 0.0
        %567 = vmatprep.subr.mxu0 0.0
        %568 = vmatpush1.msra.mxu0 0.0
        %569 = vmatprep.subr.mxu0 0.0
        %570 = vmatpush1.msra.mxu0 0.0
        %571 = vmatprep.subr.mxu0 0.0
        %572 = vmatpush1.msra.mxu0 0.0
        %573 = vmatprep.subr.mxu0 0.0
        %574 = vmatpush1.msra.mxu0 0.0
        %575 = vmatprep.subr.mxu0 0.0
        %576 = vmatpush1.msra.mxu0 0.0
        %577 = vmatprep.subr.mxu0 0.0
        %578 = vmatpush1.msra.mxu0 0.0
        %579 = vmatprep.subr.mxu0 0.0
        %580 = vmatpush1.msra.mxu0 0.0
        %581 = vmatprep.subr.mxu0 0.0
        %582 = vmatpush1.msra.mxu0 0.0
        %583 = vmatprep.subr.mxu0 0.0
        %584 = vmatpush1.msra.mxu0 0.0
        %585 = vmatprep.subr.mxu0 0.0
        %586 = vmatpush1.msra.mxu0 0.0
        %587 = vmatprep.subr.mxu0 0.0
        %588 = vmatpush1.msra.mxu0 0.0
        %589 = vmatprep.subr.mxu0 0.0
        %590 = vmatpush1.msra.mxu0 0.0
        %591 = vmatprep.subr.mxu0 0.0
        %592 = vmatpush1.msra.mxu0 0.0
        %593 = vmatprep.subr.mxu0 0.0
        %594 = vmatpush1.msra.mxu0 0.0
        %595 = vmatprep.subr.mxu0 0.0
        %596 = vmatpush1.msra.mxu0 0.0
        %597 = vmatprep.subr.mxu0 0.0
        %598 = vmatpush1.msra.mxu0 0.0
        %599 = vmatprep.mubr.f32.mxu0 0.0
        %600 = vmatmul.mubr.f32.gmra.mrb[0].mxu0 %v439
        %v601 = vpop.f32.mrb[0].mxu0
        %v602 = vadd.f32 0.0, %v601
        %v603 = vpop.f32.mrb[0].mxu0
        %604 = vmatprep.mubr.f32.mxu0 0.0
        %605 = vmatmul.mubr.f32.gmra.mrb[0].mxu0 %v442
        %v606 = vpop.f32.mrb[0].mxu0
        %v607 = vadd.f32 0.0, %v606
        %v608 = vpop.f32.mrb[0].mxu0
        %609 = vmatprep.mubr.f32.mxu0 0.0
        %610 = vmatmul.mubr.f32.gmra.mrb[0].mxu0 %v445
        %v611 = vpop.f32.mrb[0].mxu0
        %v612 = vadd.f32 0.0, %v611
        %v613 = vpop.f32.mrb[0].mxu0
        %614 = vmatprep.mubr.f32.mxu0 0.0
        %615 = vmatmul.mubr.f32.gmra.mrb[0].mxu0 %v448
        %v616 = vpop.f32.mrb[0].mxu0
        %v617 = vadd.f32 0.0, %v616
        %v618 = vpop.f32.mrb[0].mxu0
        %619 = vdwg.mxu0
        %v620 = vld [vmem:[%s3] sm:$0xff]
        %v621 = vld [vmem:[%s3 + $0x8] sm:$0xff]
        %v622 = vld [vmem:[%s4] sm:$0xff]
        %v623 = vld [vmem:[%s4 + $0x8] sm:$0xff]
        %vm624 = vcmask 261120
        %v626 = vsel %vm624, %v622, 0
        %v629 = vsel %vm624, %v623, 0
        %631 = vmatprep.subr.mxu0 0.0
        %632 = vmatpush1.msra.mxu0 %v602
        %633 = vmatprep.subr.mxu0 0.0
        %634 = vmatpush1.msra.mxu0 %v607
        %635 = vmatprep.subr.mxu0 0.0
        %636 = vmatpush1.msra.mxu0 %v612
        %637 = vmatprep.subr.mxu0 0.0
        %638 = vmatpush1.msra.mxu0 %v617
        %639 = vmatprep.subr.mxu0 0.0
        %640 = vmatpush1.msra.mxu0 0.0
        %641 = vmatprep.subr.mxu0 0.0
        %642 = vmatpush1.msra.mxu0 0.0
        %643 = vmatprep.subr.mxu0 0.0
        %644 = vmatpush1.msra.mxu0 0.0
        %645 = vmatprep.subr.mxu0 0.0
        %646 = vmatpush1.msra.mxu0 0.0
        %647 = vmatprep.subr.mxu0 0.0
        %648 = vmatpush1.msra.mxu0 0.0
        %649 = vmatprep.subr.mxu0 0.0
        %650 = vmatpush1.msra.mxu0 0.0
        %651 = vmatprep.subr.mxu0 0.0
        %652 = vmatpush1.msra.mxu0 0.0
        %653 = vmatprep.subr.mxu0 0.0
        %654 = vmatpush1.msra.mxu0 0.0
        %655 = vmatprep.subr.mxu0 0.0
        %656 = vmatpush1.msra.mxu0 0.0
        %657 = vmatprep.subr.mxu0 0.0
        %658 = vmatpush1.msra.mxu0 0.0
        %659 = vmatprep.subr.mxu0 0.0
        %660 = vmatpush1.msra.mxu0 0.0
        %661 = vmatprep.subr.mxu0 0.0
        %662 = vmatpush1.msra.mxu0 0.0
        %663 = vmatprep.subr.mxu0 0.0
        %664 = vmatpush1.msra.mxu0 0.0
        %665 = vmatprep.subr.mxu0 0.0
        %666 = vmatpush1.msra.mxu0 0.0
        %667 = vmatprep.subr.mxu0 0.0
        %668 = vmatpush1.msra.mxu0 0.0
        %669 = vmatprep.subr.mxu0 0.0
        %670 = vmatpush1.msra.mxu0 0.0
        %671 = vmatprep.subr.mxu0 0.0
        %672 = vmatpush1.msra.mxu0 0.0
        %673 = vmatprep.subr.mxu0 0.0
        %674 = vmatpush1.msra.mxu0 0.0
        %675 = vmatprep.subr.mxu0 0.0
        %676 = vmatpush1.msra.mxu0 0.0
        %677 = vmatprep.subr.mxu0 0.0
        %678 = vmatpush1.msra.mxu0 0.0
        %679 = vmatprep.subr.mxu0 0.0
        %680 = vmatpush1.msra.mxu0 0.0
        %681 = vmatprep.subr.mxu0 0.0
        %682 = vmatpush1.msra.mxu0 0.0
        %683 = vmatprep.subr.mxu0 0.0
        %684 = vmatpush1.msra.mxu0 0.0
        %685 = vmatprep.subr.mxu0 0.0
        %686 = vmatpush1.msra.mxu0 0.0
        %687 = vmatprep.subr.mxu0 0.0
        %688 = vmatpush1.msra.mxu0 0.0
        %689 = vmatprep.subr.mxu0 0.0
        %690 = vmatpush1.msra.mxu0 0.0
        %691 = vmatprep.subr.mxu0 0.0
        %692 = vmatpush1.msra.mxu0 0.0
        %693 = vmatprep.subr.mxu0 0.0
        %694 = vmatpush1.msra.mxu0 0.0
        %695 = vmatprep.mubr.f32.mxu0 0.0
        %696 = vmatmul.mubr.f32.gmra.mrb[0].mxu0 %v626
        %v697 = vpop.f32.mrb[0].mxu0
        %v698 = vadd.f32 0.0, %v697
        %v699 = vpop.f32.mrb[0].mxu0
        %700 = vmatprep.mubr.f32.mxu0 0.0
        %701 = vmatmul.mubr.f32.gmra.mrb[0].mxu0 %v629
        %v702 = vpop.f32.mrb[0].mxu0
        %v703 = vadd.f32 0.0, %v702
        %v704 = vpop.f32.mrb[0].mxu0
        %705 = vdwg.mxu0
        %v707 = vsel %vm624, %v620, 0
        %v710 = vsel %vm624, %v621, 0
        %712 = vmatprep.subr.mxu0 0.0
        %713 = vmatpush1.msra.mxu0 %v517
        %714 = vmatprep.subr.mxu0 0.0
        %715 = vmatpush1.msra.mxu0 %v522
        %716 = vmatprep.subr.mxu0 0.0
        %717 = vmatpush1.msra.mxu0 %v527
        %718 = vmatprep.subr.mxu0 0.0
        %719 = vmatpush1.msra.mxu0 %v532
        %720 = vmatprep.subr.mxu0 0.0
        %721 = vmatpush1.msra.mxu0 0.0
        %722 = vmatprep.subr.mxu0 0.0
        %723 = vmatpush1.msra.mxu0 0.0
        %724 = vmatprep.subr.mxu0 0.0
        %725 = vmatpush1.msra.mxu0 0.0
        %726 = vmatprep.subr.mxu0 0.0
        %727 = vmatpush1.msra.mxu0 0.0
        %728 = vmatprep.subr.mxu0 0.0
        %729 = vmatpush1.msra.mxu0 0.0
        %730 = vmatprep.subr.mxu0 0.0
        %731 = vmatpush1.msra.mxu0 0.0
        %732 = vmatprep.subr.mxu0 0.0
        %733 = vmatpush1.msra.mxu0 0.0
        %734 = vmatprep.subr.mxu0 0.0
        %735 = vmatpush1.msra.mxu0 0.0
        %736 = vmatprep.subr.mxu0 0.0
        %737 = vmatpush1.msra.mxu0 0.0
        %738 = vmatprep.subr.mxu0 0.0
        %739 = vmatpush1.msra.mxu0 0.0
        %740 = vmatprep.subr.mxu0 0.0
        %741 = vmatpush1.msra.mxu0 0.0
        %742 = vmatprep.subr.mxu0 0.0
        %743 = vmatpush1.msra.mxu0 0.0
        %744 = vmatprep.subr.mxu0 0.0
        %745 = vmatpush1.msra.mxu0 0.0
        %746 = vmatprep.subr.mxu0 0.0
        %747 = vmatpush1.msra.mxu0 0.0
        %748 = vmatprep.subr.mxu0 0.0
        %749 = vmatpush1.msra.mxu0 0.0
        %750 = vmatprep.subr.mxu0 0.0
        %751 = vmatpush1.msra.mxu0 0.0
        %752 = vmatprep.subr.mxu0 0.0
        %753 = vmatpush1.msra.mxu0 0.0
        %754 = vmatprep.subr.mxu0 0.0
        %755 = vmatpush1.msra.mxu0 0.0
        %756 = vmatprep.subr.mxu0 0.0
        %757 = vmatpush1.msra.mxu0 0.0
        %758 = vmatprep.subr.mxu0 0.0
        %759 = vmatpush1.msra.mxu0 0.0
        %760 = vmatprep.subr.mxu0 0.0
        %761 = vmatpush1.msra.mxu0 0.0
        %762 = vmatprep.subr.mxu0 0.0
        %763 = vmatpush1.msra.mxu0 0.0
        %764 = vmatprep.subr.mxu0 0.0
        %765 = vmatpush1.msra.mxu0 0.0
        %766 = vmatprep.subr.mxu0 0.0
        %767 = vmatpush1.msra.mxu0 0.0
        %768 = vmatprep.subr.mxu0 0.0
        %769 = vmatpush1.msra.mxu0 0.0
        %770 = vmatprep.subr.mxu0 0.0
        %771 = vmatpush1.msra.mxu0 0.0
        %772 = vmatprep.subr.mxu0 0.0
        %773 = vmatpush1.msra.mxu0 0.0
        %774 = vmatprep.subr.mxu0 0.0
        %775 = vmatpush1.msra.mxu0 0.0
        %776 = vmatprep.mubr.f32.mxu0 0.0
        %777 = vmatmul.mubr.f32.gmra.mrb[0].mxu0 %v707
        %v778 = vpop.f32.mrb[0].mxu0
        %v779 = vadd.f32 %v698, %v778
        %v780 = vpop.f32.mrb[0].mxu0
        %781 = vmatprep.mubr.f32.mxu0 0.0
        %782 = vmatmul.mubr.f32.gmra.mrb[0].mxu0 %v710
        %v783 = vpop.f32.mrb[0].mxu0
        %v784 = vadd.f32 %v703, %v783
        %v785 = vpop.f32.mrb[0].mxu0
        %786 = vdwg.mxu0
        %v787 = vld [vmem:[%s5] sm:$0xff]
        %v788 = vld [vmem:[%s5 + $0x8] sm:$0xff]
        %790 = vset.pattern.permute.xlu0 0
        %791 = vperm.xlu0 %790, %v787
        %v792 = vpop.permute.xlu0 %791
        %795 = vset.pattern.permute.xlu0 0
        %796 = vperm.xlu0 %795, %v788
        %v797 = vpop.permute.xlu0 %796
        %v799 = vadd.f32 %v779, %v792
        %v800 = vadd.f32 %v784, %v797
        %v801 = vmax.f32 %v799, 0.0
        %v802 = vmax.f32 %v800, 0.0
        %v803 = vld [vmem:[%s6] sm:$0x1]
        %s804 = sld [smem:[#allocation2]]
        %v805 = vstv %s804
        %vm806 = vcmask 130048
        %v808 = vsel %vm806, %v803, 0
        %810 = vmatprep.subr.mxu0 0.0
        %811 = vmatpush1.msra.mxu0 %v801
        %812 = vmatprep.subr.mxu0 0.0
        %813 = vmatpush1.msra.mxu0 %v802
        %814 = vmatprep.subr.mxu0 0.0
        %815 = vmatpush1.msra.mxu0 0.0
        %816 = vmatprep.subr.mxu0 0.0
        %817 = vmatpush1.msra.mxu0 0.0
        %818 = vmatprep.subr.mxu0 0.0
        %819 = vmatpush1.msra.mxu0 0.0
        %820 = vmatprep.subr.mxu0 0.0
        %821 = vmatpush1.msra.mxu0 0.0
        %822 = vmatprep.subr.mxu0 0.0
        %823 = vmatpush1.msra.mxu0 0.0
        %824 = vmatprep.subr.mxu0 0.0
        %825 = vmatpush1.msra.mxu0 0.0
        %826 = vmatprep.subr.mxu0 0.0
        %827 = vmatpush1.msra.mxu0 0.0
        %828 = vmatprep.subr.mxu0 0.0
        %829 = vmatpush1.msra.mxu0 0.0
        %830 = vmatprep.subr.mxu0 0.0
        %831 = vmatpush1.msra.mxu0 0.0
        %832 = vmatprep.subr.mxu0 0.0
        %833 = vmatpush1.msra.mxu0 0.0
        %834 = vmatprep.subr.mxu0 0.0
        %835 = vmatpush1.msra.mxu0 0.0
        %836 = vmatprep.subr.mxu0 0.0
        %837 = vmatpush1.msra.mxu0 0.0
        %838 = vmatprep.subr.mxu0 0.0
        %839 = vmatpush1.msra.mxu0 0.0
        %840 = vmatprep.subr.mxu0 0.0
        %841 = vmatpush1.msra.mxu0 0.0
        %842 = vmatprep.subr.mxu0 0.0
        %843 = vmatpush1.msra.mxu0 0.0
        %844 = vmatprep.subr.mxu0 0.0
        %845 = vmatpush1.msra.mxu0 0.0
        %846 = vmatprep.subr.mxu0 0.0
        %847 = vmatpush1.msra.mxu0 0.0
        %848 = vmatprep.subr.mxu0 0.0
        %849 = vmatpush1.msra.mxu0 0.0
        %850 = vmatprep.subr.mxu0 0.0
        %851 = vmatpush1.msra.mxu0 0.0
        %852 = vmatprep.subr.mxu0 0.0
        %853 = vmatpush1.msra.mxu0 0.0
        %854 = vmatprep.subr.mxu0 0.0
        %855 = vmatpush1.msra.mxu0 0.0
        %856 = vmatprep.subr.mxu0 0.0
        %857 = vmatpush1.msra.mxu0 0.0
        %858 = vmatprep.subr.mxu0 0.0
        %859 = vmatpush1.msra.mxu0 0.0
        %860 = vmatprep.subr.mxu0 0.0
        %861 = vmatpush1.msra.mxu0 0.0
        %862 = vmatprep.subr.mxu0 0.0
        %863 = vmatpush1.msra.mxu0 0.0
        %864 = vmatprep.subr.mxu0 0.0
        %865 = vmatpush1.msra.mxu0 0.0
        %866 = vmatprep.subr.mxu0 0.0
        %867 = vmatpush1.msra.mxu0 0.0
        %868 = vmatprep.subr.mxu0 0.0
        %869 = vmatpush1.msra.mxu0 0.0
        %870 = vmatprep.subr.mxu0 0.0
        %871 = vmatpush1.msra.mxu0 0.0
        %872 = vmatprep.subr.mxu0 0.0
        %873 = vmatpush1.msra.mxu0 0.0
        %874 = vmatprep.mubr.f32.mxu0 0.0
        %875 = vmatmul.mubr.f32.gmra.mrb[0].mxu0 %v808
        %v876 = vpop.f32.mrb[0].mxu0
        %v877 = vadd.f32 %v805, %v876
        %v878 = vpop.f32.mrb[0].mxu0
        %879 = vdwg.mxu0
        %v880 = vxor.u32 %v877, 2147483648
        %v881 = vmul.f32 %v880, 1.442695
        %v882 = vpow.pop %v881
        %v883 = vadd.f32 %v882, 1.0
        %v884 = vrcp.pop %v883
        %v885 = vmul.f32 1.0, %v884
        %886 = vst [vmem:[%s365] sm:$0x1] %v885
        %s887 = sand.u32 %s215, 1
        %s888 = scalar_lea.sflag [#allocation5], %s887
        %s889 = sand.u32 %s215, 1
        %s890 = scalar_lea.vmem [#allocation9], %s889
        // Predicated region
        $region65: #{tpu_custom_call.1} parent=51 // pred_check
          %p891 = pneg %p225
        $region66: #{tpu_custom_call.1} parent=51 // pred_check_branch
          %893 = sbr.rel (%p891) target = $region68
        $region67: #{tpu_custom_call.1} parent=51 // pred_region
          %s895 = ssub.s32 16, 16
          %896 = vsyncadd %s888, %s895
          %s897 = smul.addr %s29, 16
          %s898 = scalar_lea.hbm %s8, %s897
          %s900 = sshll.u32 %s890, 4
          %s901 = int_to_ptr.vmem [resolvable:$true] %s900
          %903 = dma.vmem_to_hbm [thread:$0]  %s901, 16, %s898, %s888
        $region68: #{tpu_custom_call.1} parent=51 // pred_fallthru
          _
      $region52: #{tpu_custom_call.1} parent=5 // pred_fallthru
        _
      %p904 = scmp.le.s32.totalorder 2, %s24
      // Predicated region
      $region69: #{tpu_custom_call.1} parent=5 // pred_check
        %p905 = pneg %p904
      $region70: #{tpu_custom_call.1} parent=5 // pred_check_branch
        %907 = sbr.rel (%p905) target = $region72
      $region71: #{tpu_custom_call.1} parent=5 // pred_region
        %s908 = ssub.s32 %s24, 2
        // Predicated region
        $region73: #{tpu_custom_call.1} parent=71 // pred_check
          %p909 = pneg %p231
        $region74: #{tpu_custom_call.1} parent=71 // pred_check_branch
          %911 = sbr.rel (%p909) target = $region76
        $region75: #{tpu_custom_call.1} parent=71 // pred_region
          %s912 = sand.u32 %s216, 1
          %s913 = scalar_lea.sflag [#allocation5], %s912
          %s914 = sand.u32 %s216, 1
          %s915 = scalar_lea.vmem [#allocation9], %s914
          %916 = dma.done %s913, 16
        $region76: #{tpu_custom_call.1} parent=71 // pred_fallthru
          _
      $region72: #{tpu_custom_call.1} parent=5 // pred_fallthru
        _
    $region6: #{tpu_custom_call.1} parent=1 // loop_footer
      %s28 = sadd.s32 1, %s24
    $region7: #{tpu_custom_call.1} parent=1 // loop_footer_branch
      %23 = sbr.rel target = $region3
    $region8: #{tpu_custom_call.1} parent=1 // loop_exit
      _
    %917 = vsyncpa [#allocation4], 1
    %s918 = scalar_lea.sflag [#allocation4], 1
    %919 = vsyncpa %s918, 1
    %920 = vsyncpa [#allocation7], 1
    %s921 = scalar_lea.sflag [#allocation7], 1
    %922 = vsyncpa %s921, 1
    %923 = vsyncpa [#allocation5], 1
    %s924 = scalar_lea.sflag [#allocation5], 1
    %925 = vsyncpa %s924, 1

</llo_original>
